<compile_context>
chip_gen: v5e
topology: v5e:2x2
jax: 0.10.0
libtpu: 0.0.40
codegen_flags: <defaults>
</compile_context>

<pallas_src>
import functools

import jax
import jax.numpy as jnp
from jax.experimental import pallas as pl
from jax.experimental.pallas import tpu as pltpu  # noqa: F401  (TPU backend)


# ---------------------------------------------------------------------------
# Pallas kernels: single-block VMEM copies (whole tensor per invocation)
# ---------------------------------------------------------------------------
def _copy_one_kernel(h_ref, o_ref):
    # One bulk VMEM->VMEM copy of the entire (1, num_layers*hidden) slab.
    o_ref[...] = h_ref[...]


def _copy_two_kernel(h_ref, c_ref, oh_ref, oc_ref):
    # Both state tensors copied in the same (grid-less) invocation.
    oh_ref[...] = h_ref[...]
    oc_ref[...] = c_ref[...]


# ---------------------------------------------------------------------------
# Wrapper
# ---------------------------------------------------------------------------
@functools.partial(jax.jit, static_argnames=("cell",))
def trainable_state_forward(enc_output, h, c=None, *, cell="GRU"):
    """Pallas implementation of TrainableState.forward.

    enc_output is accepted (to mirror the PyTorch signature) but unused,
    exactly like the reference module.
    """
    del enc_output  # unused, as in the PyTorch reference
    num_layers, one, hidden_size = h.shape
    assert one == 1

    # Lane-dense flat layout: last dim = num_layers*hidden_size, so the copy
    # is a single contiguous row rather than per-layer 32-wide partial tiles.
    flat_shape = (1, num_layers * hidden_size)
    h_flat = h.reshape(flat_shape)

    if cell == "GRU":
        out_flat = pl.pallas_call(
            _copy_one_kernel,
            out_shape=jax.ShapeDtypeStruct(flat_shape, h.dtype),
            # Output aliases the input buffer: no re-materialization.
            input_output_aliases={0: 0},
        )(h_flat)
        return out_flat.reshape(h.shape)

    elif cell == "LSTM":
        assert c is not None
        assert c.shape == h.shape, "c must match h's shape"
        assert c.dtype == h.dtype, "c must match h's dtype"
        c_flat = c.reshape(flat_shape)
        oh_flat, oc_flat = pl.pallas_call(
            _copy_two_kernel,
            out_shape=(
                jax.ShapeDtypeStruct(flat_shape, h.dtype),
                jax.ShapeDtypeStruct(flat_shape, c.dtype),
            ),
            input_output_aliases={0: 0, 1: 1},
        )(h_flat, c_flat)
        return oh_flat.reshape(h.shape), oc_flat.reshape(c.shape)

    else:
        raise ValueError(f"Unsupported cell type: {cell}")


# ---------------------------------------------------------------------------
# Parameter construction (deterministic, mirrors nn.init.uniform_(a, b))
# ---------------------------------------------------------------------------
def make_trainable_state_params(key, cell, hidden_size, num_layers,
                                a=-0.8, b=0.8, dtype=jnp.float32):
    kh, kc = jax.random.split(key)
    shape = (num_layers, 1, hidden_size)
    h = jax.random.uniform(kh, shape, dtype=dtype, minval=a, maxval=b)
    if cell == "LSTM":
        c = jax.random.uniform(kc, shape, dtype=dtype, minval=a, maxval=b)
        return h, c
    return h, None


# ---------------------------------------------------------------------------
# Demo / smoke test
# ---------------------------------------------------------------------------
if __name__ == "__main__":
    key = jax.random.PRNGKey(0)
    k_params, k_enc = jax.random.split(key)

    num_layers = 2
    hidden_size = 32
    batch = 2
    seq = 8

    # enc_output is unused by the forward, but we build one for signature parity.
    enc_output = jax.random.normal(k_enc, (batch, seq, hidden_size), jnp.float32)

    # --- GRU case ---
    h_gru, _ = make_trainable_state_params(k_params, "GRU", hidden_size, num_layers)
    out_gru = trainable_state_forward(enc_output, h_gru, cell="GRU")
    out_gru = jax.block_until_ready(out_gru)
    assert out_gru.shape == (num_layers, 1, hidden_size)
    assert jnp.allclose(out_gru, h_gru)

    # --- LSTM case ---
    h_lstm, c_lstm = make_trainable_state_params(k_params, "LSTM", hidden_size, num_layers)
    out_h, out_c = trainable_state_forward(enc_output, h_lstm, c_lstm, cell="LSTM")
    out_h = jax.block_until_ready(out_h)
    out_c = jax.block_until_ready(out_c)
    assert out_h.shape == (num_layers, 1, hidden_size)
    assert out_c.shape == (num_layers, 1, hidden_size)
    assert jnp.allclose(out_h, h_lstm)
    assert jnp.allclose(out_c, c_lstm)

    print("KERNEL_OK")
</pallas_src>

<mosaic_0001>
module attributes {stable_mosaic.version = 11 : i64} {
  func.func @_copy_one_kernel(%arg0: memref<1x64xf32, #tpu.memory_space<vmem>>, %arg1: memref<1x64xf32, #tpu.memory_space<vmem>>) attributes {dimension_semantics = [], scalar_prefetch = 0 : i64, scratch_operands = 0 : i64, tpu.core_type = #tpu.core_type<tc>} {
    %c0 = arith.constant 0 : index
    %c0_0 = arith.constant 0 : index
    %0 = vector.load %arg0[%c0, %c0_0] : memref<1x64xf32, #tpu.memory_space<vmem>>, vector<1x64xf32>
    %c0_1 = arith.constant 0 : index
    %c0_2 = arith.constant 0 : index
    %1 = vector.load %arg1[%c0_1, %c0_2] : memref<1x64xf32, #tpu.memory_space<vmem>>, vector<1x64xf32>
    tpu.vector_store %arg1[%c0_1, %c0_2], %0 {strides = array<i32>} : memref<1x64xf32, #tpu.memory_space<vmem>>, vector<1x64xf32>,
    return
  }
}

</mosaic_0001>

<llo_original>
// kernel: trainable_state_forward.1
$region0: #{trainable_state_forward.1}
  #allocation0 [shape = 'u32[]', space=smem, size = 0x4, offset = 0x4, fixed_abs, tag = 'smem constant byte address 0x4 - core index']
  #allocation1 [shape = 'u32[72,128]{1,0:T(1,128)}', space=vmem, size = 0x9000, scoped, tag = 'internal scratch']
  %s0 = inlined_call_operand.vmem [shape: f32[1,64], index: 0, kind: input, shape index: {}, may-alias: {0,1}]
  %s1 = inlined_call_operand.vmem [shape: f32[1,64], index: 1, kind: output, shape index: {}, may-alias: {0,1}]
  %s2 = sld [smem:[#allocation0]]
  $region14: #{trainable_state_forward.1} parent=0
    _
  %s4 = ssub.s32 1, %s2
  %s5 = scalar_select 0, %s4, %s2
  // Predicated region
  $region2: #{trainable_state_forward.1} parent=0 // pred_check
    _
  $region3: #{trainable_state_forward.1} parent=0 // pred_check_branch
    %7 = sbr.rel (0) target = $region5
  $region4: #{trainable_state_forward.1} parent=0 // pred_region
    _
  $region5: #{trainable_state_forward.1} parent=0 // pred_fallthru
    _
  %v8 = vld [vmem:[%s0] sm:$0x1]
  %vm9 = vcmask 516096
  %10 = vst.msk [vmem:[%s1] sm:$0x1] %vm9, %v8
  // Predicated region
  $region6: #{trainable_state_forward.1} parent=0 // pred_check
    _
  $region7: #{trainable_state_forward.1} parent=0 // pred_check_branch
    %12 = sbr.rel (0) target = $region9
  $region8: #{trainable_state_forward.1} parent=0 // pred_region
    _
  $region9: #{trainable_state_forward.1} parent=0 // pred_fallthru
    _
  // Predicated region
  $region10: #{trainable_state_forward.1} parent=0 // pred_check
    _
  $region11: #{trainable_state_forward.1} parent=0 // pred_check_branch
    %14 = sbr.rel (0) target = $region13
  $region12: #{trainable_state_forward.1} parent=0 // pred_region
    _
  $region13: #{trainable_state_forward.1} parent=0 // pred_fallthru
    _

</llo_original>
